<compile_context>
chip_gen: v7x
topology: tpu7x:2x2x1
jax: 0.10.0
libtpu: 0.0.40
codegen_flags: <defaults>
</compile_context>

<pallas_src>
import functools

import jax
import jax.numpy as jnp
from jax.experimental import pallas as pl
from jax.experimental.pallas import tpu as pltpu

_EPS = 1e-8                    # PyTorch nn.CosineSimilarity default eps
_OUT_SUB, _OUT_LANE = 8, 128   # dense (8,128) output slab per grid step


def _mixed_loss_kernel(temp_ref, a_ref, p_ref, n_ref, out_ref, *,
                       batch, block_rows):
    a = a_ref[...]
    p = p_ref[...]
    n = n_ref[...]

    if a.dtype == jnp.float32:
        def rowdot(x, y):                                   # f32 products
            return jnp.sum(x * y, axis=1, keepdims=True)
    else:
        # bf16/f16 inputs: products in the packed native dtype (2x elems per
        # vreg on v6e/v7x), accumulate the D-axis reduction in f32.
        def rowdot(x, y):
            return jnp.sum(x * y, axis=1, keepdims=True, dtype=jnp.float32)

    aa = rowdot(a, a)                                       # (TB, 1) f32
    pp = rowdot(p, p)
    nn = rowdot(n, n)
    ap = rowdot(a, p)
    an = rowdot(a, n)

    # cos = dot / max(||x||*||y||, eps) == dot * rsqrt(max(xx*yy, eps^2)).
    eps2 = _EPS * _EPS
    p_cos = ap * jax.lax.rsqrt(jnp.maximum(aa * pp, eps2))
    n_cos = an * jax.lax.rsqrt(jnp.maximum(aa * nn, eps2))

    # Mask rows past the true batch size (ragged last tile reads padding).
    row = (pl.program_id(0) * block_rows
           + jax.lax.broadcasted_iota(jnp.int32, (block_rows, 1), 0))
    valid = row < batch

    gt = n_cos > p_cos
    hn = jnp.logical_and(gt, valid)                    # hard negatives
    nh = jnp.logical_and(jnp.logical_not(gt), valid)   # ~hn, in-bounds only

    inv_temp = 1.0 / temp_ref[0]
    # NaN/Inf from padded-row garbage cannot leak through these selects.
    exp_p = jnp.where(nh, jnp.exp(p_cos * inv_temp), 0.0)
    exp_n = jnp.where(nh, jnp.exp(n_cos * inv_temp), 0.0)
    hn_nc = jnp.where(hn, n_cos, 0.0)

    sp = jnp.sum(exp_p)
    sn = jnp.sum(exp_n)
    hs = jnp.sum(hn_nc)

    # Single lane-dense output slab per grid step: lanes 0/1/2 carry sp/sn/hs
    # (replicated across sublanes), everything else 0.  One unmasked store +
    # one output DMA instead of three (1,1,1) masked stores.
    lane = jax.lax.broadcasted_iota(jnp.int32, (1, _OUT_SUB, _OUT_LANE), 2)
    out_ref[...] = jnp.where(lane == 0, sp,
                   jnp.where(lane == 1, sn,
                   jnp.where(lane == 2, hs, 0.0)))


def _round_up(x, m):
    return ((x + m - 1) // m) * m


def _vmem_capacity_bytes():
    try:
        cap = getattr(pltpu.get_tpu_info(), "vmem_capacity_bytes", None)
        if cap:
            return int(cap)
    except Exception:
        pass
    return 64 << 20           # conservative fallback: fits every generation


def _budgets():
    """(input-tile budget, scoped-VMEM limit), generation aware."""
    cap = _vmem_capacity_bytes()
    if cap <= (64 << 20):             # v7x: 64 MiB per TensorCore
        return 20 << 20, 48 << 20     # leave room for f32 upcast temporaries
    return 40 << 20, 96 << 20         # v5e / v6e: 128 MiB


def _pick_block_rows(batch, d, itemsize, tile_budget_bytes):
    """Largest multiple-of-8 row tile whose 3 inputs x 2 pipeline buffers fit
    the budget, capped so the grid keeps >= 2 blocks (v7x has 2 TensorCores)."""
    bytes_per_row = 3 * 2 * d * itemsize
    tb = max(8, (tile_budget_bytes // bytes_per_row) // 8 * 8)
    padded_batch = _round_up(batch, 8)
    tb = min(tb, padded_batch)
    if padded_batch >= 16:
        tb = min(tb, _round_up(pl.cdiv(padded_batch, 2), 8))
    return int(tb)


def mixed_loss(a_embed, p_embed, n_embed, temp, *, block_rows=None):
    """Pallas TPU implementation of MixedLoss.forward. Returns a scalar."""
    assert a_embed.shape == p_embed.shape == n_embed.shape
    assert a_embed.ndim == 2
    batch, d = a_embed.shape

    tile_budget, vmem_limit = _budgets()
    if block_rows is None:
        block_rows = _pick_block_rows(batch, d, a_embed.dtype.itemsize,
                                      tile_budget)
    num_blocks = pl.cdiv(batch, block_rows)

    kernel = functools.partial(
        _mixed_loss_kernel, batch=batch, block_rows=block_rows)
    temp_arr = jnp.asarray([temp], dtype=jnp.float32)

    # TODO(synk): if production D is not a multiple of 128, pad D at the
    # producer (zero-padding is cosine-neutral) so vregs/VMEM are not D/128
    # padded inside the kernel.
    emb_spec = pl.BlockSpec((block_rows, d), lambda i: (i, 0))

    parts = pl.pallas_call(
        kernel,
        out_shape=jax.ShapeDtypeStruct((num_blocks, _OUT_SUB, _OUT_LANE),
                                       jnp.float32),
        grid_spec=pltpu.PrefetchScalarGridSpec(
            num_scalar_prefetch=0,
            grid=(num_blocks,),
            in_specs=[
                pl.BlockSpec(memory_space=pltpu.MemorySpace.SMEM),  # temp
                emb_spec, emb_spec, emb_spec,
            ],
            out_specs=pl.BlockSpec((1, _OUT_SUB, _OUT_LANE),
                                   lambda i: (i, 0, 0)),
        ),
        compiler_params=pltpu.CompilerParams(
            dimension_semantics=("parallel",),
            vmem_limit_bytes=int(vmem_limit)),
    )(temp_arr, a_embed, p_embed, n_embed)

    # Cross-block reduction + two-log scalar finalize in plain JAX.
    totals = jnp.sum(parts[:, 0, :], axis=0)        # (128,)
    s_p, s_n, hn_loss = totals[0], totals[1], totals[2]
    denom = s_p + s_n
    return hn_loss - jnp.log(s_p / denom) - jnp.log(s_n / denom)


def mixed_loss_ref(a, p, n, temp):
    """Pure-JAX reference matching the PyTorch module."""
    def cos(x, y):
        num = jnp.sum(x * y, axis=1)
        den = jnp.maximum(
            jnp.sqrt(jnp.sum(x * x, axis=1)) * jnp.sqrt(jnp.sum(y * y, axis=1)),
            _EPS)
        return num / den

    p_cos = cos(a, p)
    n_cos = cos(a, n)
    hn = n_cos > p_cos
    nh = jnp.logical_not(hn)
    s_p = jnp.sum(jnp.where(nh, jnp.exp(p_cos / temp), 0.0))
    s_n = jnp.sum(jnp.where(nh, jnp.exp(n_cos / temp), 0.0))
    denom = s_p + s_n
    not_hn_loss = -jnp.log(s_p / denom) - jnp.log(s_n / denom)
    hn_loss = jnp.sum(jnp.where(hn, n_cos, 0.0))
    return hn_loss + not_hn_loss


if __name__ == "__main__":
    B, D = 13, 32          # B deliberately not a multiple of 8 (ragged tile)
    temp = 0.5

    key = jax.random.PRNGKey(0)
    ka, kp, kn = jax.random.split(key, 3)
    a = jax.random.normal(ka, (B, D), dtype=jnp.float32)
    p_rand = jax.random.normal(kp, (B, D), dtype=jnp.float32)
    n_rand = jax.random.normal(kn, (B, D), dtype=jnp.float32)

    # Rows 0..8: positive close to anchor -> not hard negatives.
    # Rows 9..12: negative close to anchor -> hard negatives.
    # Guarantees both branches of the loss are exercised (no log(0)).
    row = jnp.arange(B)[:, None]
    p = jnp.where(row < 9, a + 0.1 * p_rand, p_rand)
    n = jnp.where(row < 9, n_rand, a + 0.1 * n_rand)

    # f32 path: auto tile picker gives block_rows=8 -> 2 blocks, masked tail.
    out = jax.block_until_ready(mixed_loss(a, p, n, temp))
    ref = mixed_loss_ref(a, p, n, temp)
    assert jnp.allclose(out, ref, rtol=1e-4, atol=1e-4), (out, ref)

    # bf16 path: half the HBM bytes; bf16 products + f32 accumulation.
    a16, p16, n16 = (x.astype(jnp.bfloat16) for x in (a, p, n))
    out16 = jax.block_until_ready(mixed_loss(a16, p16, n16, temp))
    ref16 = mixed_loss_ref(a16.astype(jnp.float32), p16.astype(jnp.float32),
                           n16.astype(jnp.float32), temp)
    assert jnp.allclose(out16, ref16, rtol=5e-2, atol=1e-1), (out16, ref16)

    print("KERNEL_OK")
</pallas_src>

<mosaic_0001>
module attributes {stable_mosaic.version = 11 : i64} {
  func.func @_mixed_loss_kernel(%arg0: i32, %arg1: memref<1xf32, #tpu.memory_space<smem>>, %arg2: memref<8x32xf32, #tpu.memory_space<vmem>>, %arg3: memref<8x32xf32, #tpu.memory_space<vmem>>, %arg4: memref<8x32xf32, #tpu.memory_space<vmem>>, %arg5: memref<1x8x128xf32, #tpu.memory_space<vmem>>) attributes {dimension_semantics = [#tpu.dimension_semantics<parallel>], iteration_bounds = array<i64: 2>, scalar_prefetch = 0 : i64, scratch_operands = 0 : i64, tpu.core_type = #tpu.core_type<tc>, window_params = [{transform_indices = @transform_0, window_bounds = array<i64: 1>}, {transform_indices = @transform_1, window_bounds = array<i64: 8, 32>}, {transform_indices = @transform_2, window_bounds = array<i64: 8, 32>}, {transform_indices = @transform_3, window_bounds = array<i64: 8, 32>}, {transform_indices = @transform_4, window_bounds = array<i64: 1, 8, 128>}]} {
    %c0 = arith.constant 0 : index
    %c0_0 = arith.constant 0 : index
    %0 = vector.load %arg2[%c0, %c0_0] : memref<8x32xf32, #tpu.memory_space<vmem>>, vector<8x32xf32>
    %c0_1 = arith.constant 0 : index
    %c0_2 = arith.constant 0 : index
    %1 = vector.load %arg3[%c0_1, %c0_2] : memref<8x32xf32, #tpu.memory_space<vmem>>, vector<8x32xf32>
    %c0_3 = arith.constant 0 : index
    %c0_4 = arith.constant 0 : index
    %2 = vector.load %arg4[%c0_3, %c0_4] : memref<8x32xf32, #tpu.memory_space<vmem>>, vector<8x32xf32>
    %3 = arith.mulf %0, %0 : vector<8x32xf32>
    %cst = arith.constant dense<0.000000e+00> : vector<8xf32>
    %4 = vector.multi_reduction <add>, %3, %cst [1] : vector<8x32xf32> to vector<8xf32>
    %5 = vector.shape_cast %4 : vector<8xf32> to vector<8x1xf32>
    %6 = arith.mulf %1, %1 : vector<8x32xf32>
    %cst_5 = arith.constant dense<0.000000e+00> : vector<8xf32>
    %7 = vector.multi_reduction <add>, %6, %cst_5 [1] : vector<8x32xf32> to vector<8xf32>
    %8 = vector.shape_cast %7 : vector<8xf32> to vector<8x1xf32>
    %9 = arith.mulf %2, %2 : vector<8x32xf32>
    %cst_6 = arith.constant dense<0.000000e+00> : vector<8xf32>
    %10 = vector.multi_reduction <add>, %9, %cst_6 [1] : vector<8x32xf32> to vector<8xf32>
    %11 = vector.shape_cast %10 : vector<8xf32> to vector<8x1xf32>
    %12 = arith.mulf %0, %1 : vector<8x32xf32>
    %cst_7 = arith.constant dense<0.000000e+00> : vector<8xf32>
    %13 = vector.multi_reduction <add>, %12, %cst_7 [1] : vector<8x32xf32> to vector<8xf32>
    %14 = vector.shape_cast %13 : vector<8xf32> to vector<8x1xf32>
    %15 = arith.mulf %0, %2 : vector<8x32xf32>
    %cst_8 = arith.constant dense<0.000000e+00> : vector<8xf32>
    %16 = vector.multi_reduction <add>, %15, %cst_8 [1] : vector<8x32xf32> to vector<8xf32>
    %17 = vector.shape_cast %16 : vector<8xf32> to vector<8x1xf32>
    %18 = arith.mulf %5, %8 : vector<8x1xf32>
    %cst_9 = arith.constant 1.000000e-16 : f32
    %19 = vector.broadcast %cst_9 : f32 to vector<8x1xf32>
    %20 = arith.maximumf %18, %19 : vector<8x1xf32>
    %21 = math.rsqrt %20 : vector<8x1xf32>
    %22 = arith.mulf %14, %21 : vector<8x1xf32>
    %23 = arith.mulf %5, %11 : vector<8x1xf32>
    %cst_10 = arith.constant 1.000000e-16 : f32
    %24 = vector.broadcast %cst_10 : f32 to vector<8x1xf32>
    %25 = arith.maximumf %23, %24 : vector<8x1xf32>
    %26 = math.rsqrt %25 : vector<8x1xf32>
    %27 = arith.mulf %17, %26 : vector<8x1xf32>
    %c8_i32 = arith.constant 8 : i32
    %28 = arith.muli %arg0, %c8_i32 : i32
    %29 = tpu.iota {dimensions = array<i32: 0>} : vector<8x1xi32>
    %30 = vector.broadcast %28 : i32 to vector<8x1xi32>
    %31 = arith.addi %30, %29 : vector<8x1xi32>
    %c13_i32 = arith.constant 13 : i32
    %32 = vector.broadcast %c13_i32 : i32 to vector<8x1xi32>
    %33 = arith.cmpi slt, %31, %32 : vector<8x1xi32>
    %34 = arith.cmpf ogt, %27, %22 : vector<8x1xf32>
    %35 = arith.andi %34, %33 : vector<8x1xi1>
    %cst_11 = arith.constant dense<true> : vector<8x1xi1>
    %36 = arith.xori %34, %cst_11 : vector<8x1xi1>
    %37 = arith.andi %36, %33 : vector<8x1xi1>
    %c0_12 = arith.constant 0 : index
    %38 = memref.load %arg1[%c0_12] : memref<1xf32, #tpu.memory_space<smem>>
    %cst_13 = arith.constant 1.000000e+00 : f32
    %39 = arith.divf %cst_13, %38 : f32
    %40 = vector.broadcast %39 : f32 to vector<8x1xf32>
    %41 = arith.mulf %22, %40 : vector<8x1xf32>
    %42 = math.exp %41 : vector<8x1xf32>
    %cst_14 = arith.constant 0.000000e+00 : f32
    %43 = vector.broadcast %cst_14 : f32 to vector<8x1xf32>
    %44 = arith.select %37, %42, %43 : vector<8x1xi1>, vector<8x1xf32>
    %45 = vector.broadcast %39 : f32 to vector<8x1xf32>
    %46 = arith.mulf %27, %45 : vector<8x1xf32>
    %47 = math.exp %46 : vector<8x1xf32>
    %cst_15 = arith.constant 0.000000e+00 : f32
    %48 = vector.broadcast %cst_15 : f32 to vector<8x1xf32>
    %49 = arith.select %37, %47, %48 : vector<8x1xi1>, vector<8x1xf32>
    %cst_16 = arith.constant 0.000000e+00 : f32
    %50 = vector.broadcast %cst_16 : f32 to vector<8x1xf32>
    %51 = arith.select %35, %27, %50 : vector<8x1xi1>, vector<8x1xf32>
    %52 = vector.shape_cast %44 : vector<8x1xf32> to vector<1x8x1xf32>
    %cst_17 = arith.constant dense<0.000000e+00> : vector<1xf32>
    %53 = vector.multi_reduction <add>, %52, %cst_17 [1, 2] : vector<1x8x1xf32> to vector<1xf32>
    %54 = vector.shape_cast %53 : vector<1xf32> to vector<1x1x1xf32>
    %55 = vector.extract %54[0, 0, 0] : f32 from vector<1x1x1xf32>
    %56 = vector.shape_cast %49 : vector<8x1xf32> to vector<1x8x1xf32>
    %cst_18 = arith.constant dense<0.000000e+00> : vector<1xf32>
    %57 = vector.multi_reduction <add>, %56, %cst_18 [1, 2] : vector<1x8x1xf32> to vector<1xf32>
    %58 = vector.shape_cast %57 : vector<1xf32> to vector<1x1x1xf32>
    %59 = vector.extract %58[0, 0, 0] : f32 from vector<1x1x1xf32>
    %60 = vector.shape_cast %51 : vector<8x1xf32> to vector<1x8x1xf32>
    %cst_19 = arith.constant dense<0.000000e+00> : vector<1xf32>
    %61 = vector.multi_reduction <add>, %60, %cst_19 [1, 2] : vector<1x8x1xf32> to vector<1xf32>
    %62 = vector.shape_cast %61 : vector<1xf32> to vector<1x1x1xf32>
    %63 = vector.extract %62[0, 0, 0] : f32 from vector<1x1x1xf32>
    %64 = tpu.iota {dimensions = array<i32: 2>} : vector<1x8x128xi32>
    %c0_i32 = arith.constant 0 : i32
    %65 = vector.broadcast %c0_i32 : i32 to vector<1x8x128xi32>
    %66 = arith.cmpi eq, %64, %65 : vector<1x8x128xi32>
    %c1_i32 = arith.constant 1 : i32
    %67 = vector.broadcast %c1_i32 : i32 to vector<1x8x128xi32>
    %68 = arith.cmpi eq, %64, %67 : vector<1x8x128xi32>
    %c2_i32 = arith.constant 2 : i32
    %69 = vector.broadcast %c2_i32 : i32 to vector<1x8x128xi32>
    %70 = arith.cmpi eq, %64, %69 : vector<1x8x128xi32>
    %cst_20 = arith.constant 0.000000e+00 : f32
    %71 = vector.broadcast %63 : f32 to vector<1x8x128xf32>
    %72 = vector.broadcast %cst_20 : f32 to vector<1x8x128xf32>
    %73 = arith.select %70, %71, %72 : vector<1x8x128xi1>, vector<1x8x128xf32>
    %74 = vector.broadcast %59 : f32 to vector<1x8x128xf32>
    %75 = arith.select %68, %74, %73 : vector<1x8x128xi1>, vector<1x8x128xf32>
    %76 = vector.broadcast %55 : f32 to vector<1x8x128xf32>
    %77 = arith.select %66, %76, %75 : vector<1x8x128xi1>, vector<1x8x128xf32>
    %c0_21 = arith.constant 0 : index
    %c0_22 = arith.constant 0 : index
    %c0_23 = arith.constant 0 : index
    %78 = vector.load %arg5[%c0_21, %c0_22, %c0_23] : memref<1x8x128xf32, #tpu.memory_space<vmem>>, vector<1x8x128xf32>
    tpu.vector_store %arg5[%c0_21, %c0_22, %c0_23], %77 {strides = array<i32>} : memref<1x8x128xf32, #tpu.memory_space<vmem>>, vector<1x8x128xf32>,
    return
  }
  func.func @transform_0(%arg0: i32) -> i32 {
    %c0_i32 = arith.constant 0 : i32
    %c0_i32_0 = arith.constant 0 : i32
    return %c0_i32 : i32
  }
  func.func @transform_1(%arg0: i32) -> (i32, i32) {
    %c0_i32 = arith.constant 0 : i32
    %c0_i32_0 = arith.constant 0 : i32
    return %arg0, %c0_i32 : i32, i32
  }
  func.func @transform_2(%arg0: i32) -> (i32, i32) {
    %c0_i32 = arith.constant 0 : i32
    %c0_i32_0 = arith.constant 0 : i32
    return %arg0, %c0_i32 : i32, i32
  }
  func.func @transform_3(%arg0: i32) -> (i32, i32) {
    %c0_i32 = arith.constant 0 : i32
    %c0_i32_0 = arith.constant 0 : i32
    return %arg0, %c0_i32 : i32, i32
  }
  func.func @transform_4(%arg0: i32) -> (i32, i32, i32) {
    %c0_i32 = arith.constant 0 : i32
    %c0_i32_0 = arith.constant 0 : i32
    %c0_i32_1 = arith.constant 0 : i32
    return %arg0, %c0_i32, %c0_i32_0 : i32, i32, i32
  }
}

</mosaic_0001>

<llo_original>
// kernel: tpu_custom_call.1
$region0: #{tpu_custom_call.1}
  #allocation0 [shape = 'u32[]', space=smem, size = 0x4, offset = 0x4, fixed_abs, tag = 'smem constant byte address 0x4 - core index']
  #allocation1 [shape = 'u32[144,128]{1,0:T(1,128)}', space=vmem, size = 0x12000, scoped, tag = 'internal scratch']
  #allocation2 [shape = 'f32[1]{0:T(128)S(6)}', space=smem, size = 0x200, scoped, tag = 'scoped memory for tpu_custom_call.1']
  %s0 = inlined_call_operand.<no memory space> [shape: f32[1], index: 0, kind: input, shape index: {}]
  %s1 = inlined_call_operand.hbm [shape: f32[13,32], index: 1, kind: input, shape index: {}]
  %s2 = inlined_call_operand.hbm [shape: f32[13,32], index: 2, kind: input, shape index: {}]
  %s3 = inlined_call_operand.hbm [shape: f32[13,32], index: 3, kind: input, shape index: {}]
  %s4 = inlined_call_operand.hbm [shape: f32[2,8,128], index: 4, kind: output, shape index: {}]
  %s5 = sld [smem:[#allocation0]]
  $region61: #{tpu_custom_call.1} parent=0
    _
  %s7 = ssub.s32 1, %s5
  %s8 = scalar_select 0, %s7, %s5
  %9 = sst [smem:[#allocation2]] %s0
  $region1: #{tpu_custom_call.1} parent=0
    #allocation3 [shape = 'u8[8192]{0}', space=vmem, size = 0x2000, scoped, tag = 'input window, operand 1']
    #allocation4 [shape = 's32[2]{0}', space=sflag, size = 0x8, scoped, tag = 'scoped memory for tpu_custom_call.1']
    #allocation5 [shape = 's32[2]{0}', space=sflag, size = 0x8, scoped, tag = 'scoped memory for tpu_custom_call.1']
    #allocation6 [shape = 'u8[8192]{0}', space=vmem, size = 0x2000, scoped, tag = 'input window, operand 2']
    #allocation7 [shape = 's32[2]{0}', space=sflag, size = 0x8, scoped, tag = 'scoped memory for tpu_custom_call.1']
    #allocation8 [shape = 'u8[8192]{0}', space=vmem, size = 0x2000, scoped, tag = 'input window, operand 3']
    #allocation9 [shape = 'u8[8192]{0}', space=vmem, size = 0x2000, scoped, tag = 'output window, operand 0']
    %10 = vsyncpa [#allocation4], 0
    %s11 = scalar_lea.sflag [#allocation4], 1
    %12 = vsyncpa %s11, 0
    %13 = vsyncpa [#allocation7], 0
    %s14 = scalar_lea.sflag [#allocation7], 1
    %15 = vsyncpa %s14, 0
    %16 = vsyncpa [#allocation5], 0
    %s17 = scalar_lea.sflag [#allocation5], 1
    %18 = vsyncpa %s17, 0
    loop: start=0, step=1, limit=4
    $region2: #{tpu_custom_call.1} parent=1 // loop_pre_header
      _
    $region3: #{tpu_custom_call.1} parent=1 // loop_header
      %s20 = sphi 0, %s24
      %p21 = scmp.ge.s32.totalorder %s20, 4
      %s28 = sphi 0, %s28
      %s30 = sphi 0, %s28
      %s31 = sphi 0, %s30
      %s45 = sphi 0, %s31
      %s51 = sphi 0, %s53
      %s54 = sphi 0, %s51
      %s55 = sphi 0, %s54
      %s71 = sphi 0, %s55
      %s77 = sphi 0, %s79
      %s80 = sphi 0, %s77
      %s81 = sphi 0, %s80
      %s97 = sphi 0, %s81
      %s103 = sphi 0, %s105
      %s106 = sphi 0, %s103
      %s107 = sphi 0, %s106
      %s123 = sphi 0, %s107
      %s129 = sphi 0, %s131
      %s132 = sphi 0, %s129
      %s133 = sphi 0, %s132
      %s149 = sphi 0, %s133
    $region4: #{tpu_custom_call.1} parent=1 // loop_header_branch
      %23 = sbr.rel (%p21) target = $region8
    $region5: #{tpu_custom_call.1} parent=1 // loop_body
      %s25 = ssub.s32 %s20, 1
      %s26 = ssub.s32 %s20, 2
      %s27 = sadd.s32 %s20, 1
      %s29 = sadd.s32 %s28, 1
      %p32 = scmp.eq.s32.totalorder %s20, 1
      %p33 = scmp.ne.s32.totalorder %s28, %s30
      %p34 = scmp.eq.s32.totalorder %s20, 0
      %p35 = por %p33, %p34
      %p36 = scmp.ne.s32.totalorder %s28, %s30
      %p37 = scmp.eq.s32.totalorder %s25, 1
      %p38 = por %p36, %p37
      %p39 = scmp.ne.s32.totalorder %s30, %s31
      %p40 = scmp.eq.s32.totalorder %s25, 0
      %p41 = por %p39, %p40
      %p42 = scmp.ne.s32.totalorder %s30, %s31
      %p43 = scmp.eq.s32.totalorder %s26, 1
      %p44 = por %p42, %p43
      %p46 = scmp.ne.s32.totalorder %s31, %s45
      %p47 = scmp.eq.s32.totalorder %s26, 0
      %p48 = por %p46, %p47
      %s49 = ssub.s32 %s20, %s27
      %p50 = scmp.eq.s32.totalorder %s49, 0
      %s52 = sadd.s32 %s51, 1
      %s53 = scalar_select %p50, %s51, %s52
      %p56 = pneg %p50
      %p57 = scmp.eq.s32.totalorder %s20, 1
      %p58 = por %p56, %p57
      %p59 = scmp.ne.s32.totalorder %s51, %s54
      %p60 = scmp.eq.s32.totalorder %s20, 0
      %p61 = por %p59, %p60
      %p62 = scmp.ne.s32.totalorder %s51, %s54
      %p63 = scmp.eq.s32.totalorder %s25, 1
      %p64 = por %p62, %p63
      %p65 = scmp.ne.s32.totalorder %s54, %s55
      %p66 = scmp.eq.s32.totalorder %s25, 0
      %p67 = por %p65, %p66
      %p68 = scmp.ne.s32.totalorder %s54, %s55
      %p69 = scmp.eq.s32.totalorder %s26, 1
      %p70 = por %p68, %p69
      %p72 = scmp.ne.s32.totalorder %s55, %s71
      %p73 = scmp.eq.s32.totalorder %s26, 0
      %p74 = por %p72, %p73
      %s75 = ssub.s32 %s20, %s27
      %p76 = scmp.eq.s32.totalorder %s75, 0
      %s78 = sadd.s32 %s77, 1
      %s79 = scalar_select %p76, %s77, %s78
      %p82 = pneg %p76
      %p83 = scmp.eq.s32.totalorder %s20, 1
      %p84 = por %p82, %p83
      %p85 = scmp.ne.s32.totalorder %s77, %s80
      %p86 = scmp.eq.s32.totalorder %s20, 0
      %p87 = por %p85, %p86
      %p88 = scmp.ne.s32.totalorder %s77, %s80
      %p89 = scmp.eq.s32.totalorder %s25, 1
      %p90 = por %p88, %p89
      %p91 = scmp.ne.s32.totalorder %s80, %s81
      %p92 = scmp.eq.s32.totalorder %s25, 0
      %p93 = por %p91, %p92
      %p94 = scmp.ne.s32.totalorder %s80, %s81
      %p95 = scmp.eq.s32.totalorder %s26, 1
      %p96 = por %p94, %p95
      %p98 = scmp.ne.s32.totalorder %s81, %s97
      %p99 = scmp.eq.s32.totalorder %s26, 0
      %p100 = por %p98, %p99
      %s101 = ssub.s32 %s20, %s27
      %p102 = scmp.eq.s32.totalorder %s101, 0
      %s104 = sadd.s32 %s103, 1
      %s105 = scalar_select %p102, %s103, %s104
      %p108 = pneg %p102
      %p109 = scmp.eq.s32.totalorder %s20, 1
      %p110 = por %p108, %p109
      %p111 = scmp.ne.s32.totalorder %s103, %s106
      %p112 = scmp.eq.s32.totalorder %s20, 0
      %p113 = por %p111, %p112
      %p114 = scmp.ne.s32.totalorder %s103, %s106
      %p115 = scmp.eq.s32.totalorder %s25, 1
      %p116 = por %p114, %p115
      %p117 = scmp.ne.s32.totalorder %s106, %s107
      %p118 = scmp.eq.s32.totalorder %s25, 0
      %p119 = por %p117, %p118
      %p120 = scmp.ne.s32.totalorder %s106, %s107
      %p121 = scmp.eq.s32.totalorder %s26, 1
      %p122 = por %p120, %p121
      %p124 = scmp.ne.s32.totalorder %s107, %s123
      %p125 = scmp.eq.s32.totalorder %s26, 0
      %p126 = por %p124, %p125
      %s127 = ssub.s32 %s20, %s27
      %p128 = scmp.eq.s32.totalorder %s127, 0
      %s130 = sadd.s32 %s129, 1
      %s131 = scalar_select %p128, %s129, %s130
      %p134 = pneg %p128
      %p135 = scmp.eq.s32.totalorder %s20, 1
      %p136 = por %p134, %p135
      %p137 = scmp.ne.s32.totalorder %s129, %s132
      %p138 = scmp.eq.s32.totalorder %s20, 0
      %p139 = por %p137, %p138
      %p140 = scmp.ne.s32.totalorder %s129, %s132
      %p141 = scmp.eq.s32.totalorder %s25, 1
      %p142 = por %p140, %p141
      %p143 = scmp.ne.s32.totalorder %s132, %s133
      %p144 = scmp.eq.s32.totalorder %s25, 0
      %p145 = por %p143, %p144
      %p146 = scmp.ne.s32.totalorder %s132, %s133
      %p147 = scmp.eq.s32.totalorder %s26, 1
      %p148 = por %p146, %p147
      %p150 = scmp.ne.s32.totalorder %s133, %s149
      %p151 = scmp.eq.s32.totalorder %s26, 0
      %p152 = por %p150, %p151
      %p153 = scmp.le.s32.totalorder 1, %s20
      %p154 = scmp.lt.s32.totalorder %s20, 3
      %p155 = pnand %p153, %p154
      %p156 = pneg %p155
      // Predicated region
      $region9: #{tpu_custom_call.1} parent=5 // pred_check
        _
      $region10: #{tpu_custom_call.1} parent=5 // pred_check_branch
        %158 = sbr.rel (%p155) target = $region12
      $region11: #{tpu_custom_call.1} parent=5 // pred_region
        %s159 = ssub.s32 %s20, 1
        // Predicated region
        $region13: #{tpu_custom_call.1} parent=11 // pred_check
          %p160 = pneg %p41
        $region14: #{tpu_custom_call.1} parent=11 // pred_check_branch
          %162 = sbr.rel (%p160) target = $region16
        $region15: #{tpu_custom_call.1} parent=11 // pred_region
          _
        $region16: #{tpu_custom_call.1} parent=11 // pred_fallthru
          _
      $region12: #{tpu_custom_call.1} parent=5 // pred_fallthru
        _
      %p163 = scmp.lt.s32.totalorder %s20, 2
      // Predicated region
      $region17: #{tpu_custom_call.1} parent=5 // pred_check
        %p164 = pneg %p163
      $region18: #{tpu_custom_call.1} parent=5 // pred_check_branch
        %166 = sbr.rel (%p164) target = $region20
      $region19: #{tpu_custom_call.1} parent=5 // pred_region
        // Predicated region
        $region21: #{tpu_custom_call.1} parent=19 // pred_check
          %p167 = pneg %p61
        $region22: #{tpu_custom_call.1} parent=19 // pred_check_branch
          %169 = sbr.rel (%p167) target = $region24
        $region23: #{tpu_custom_call.1} parent=19 // pred_region
          %s170 = sand.u32 %s51, 1
          %s171 = scalar_lea.sflag [#allocation4], %s170
          %s172 = sand.u32 %s51, 1
          %s173 = smul.addr %s172, 8
          %s174 = scalar_lea.vmem [#allocation3], %s173
          %s176 = ssub.s32 128, 128
          %177 = vsyncadd %s171, %s176
          %s178 = smul.addr %s20, 128
          %s179 = scalar_lea.hbm %s1, %s178
          %s181 = sshll.u32 %s174, 4
          %s182 = int_to_ptr.vmem [resolvable:$true] %s181
          %184 = dma.hbm_to_vmem [thread:$0]  %s179, 128, %s182, %s171
        $region24: #{tpu_custom_call.1} parent=19 // pred_fallthru
          _
        // Predicated region
        $region25: #{tpu_custom_call.1} parent=19 // pred_check
          %p185 = pneg %p87
        $region26: #{tpu_custom_call.1} parent=19 // pred_check_branch
          %187 = sbr.rel (%p185) target = $region28
        $region27: #{tpu_custom_call.1} parent=19 // pred_region
          %s188 = sand.u32 %s20, 1
          %s189 = scalar_lea.sflag [#allocation7], %s188
          %s190 = sand.u32 %s77, 1
          %s191 = smul.addr %s190, 8
          %s192 = scalar_lea.vmem [#allocation6], %s191
          %s194 = ssub.s32 128, 128
          %195 = vsyncadd %s189, %s194
          %s196 = smul.addr %s20, 128
          %s197 = scalar_lea.hbm %s2, %s196
          %s199 = sshll.u32 %s192, 4
          %s200 = int_to_ptr.vmem [resolvable:$true] %s199
          %202 = dma.hbm_to_vmem [thread:$0]  %s197, 128, %s200, %s189
        $region28: #{tpu_custom_call.1} parent=19 // pred_fallthru
          _
        // Predicated region
        $region29: #{tpu_custom_call.1} parent=19 // pred_check
          %p203 = pneg %p113
        $region30: #{tpu_custom_call.1} parent=19 // pred_check_branch
          %205 = sbr.rel (%p203) target = $region32
        $region31: #{tpu_custom_call.1} parent=19 // pred_region
          %s206 = sand.u32 %s20, 1
          %s207 = scalar_lea.sflag [#allocation7], %s206
          %s208 = sand.u32 %s103, 1
          %s209 = smul.addr %s208, 8
          %s210 = scalar_lea.vmem [#allocation8], %s209
          %s212 = ssub.s32 128, 128
          %213 = vsyncadd %s207, %s212
          %s214 = smul.addr %s20, 128
          %s215 = scalar_lea.hbm %s3, %s214
          %s217 = sshll.u32 %s210, 4
          %s218 = int_to_ptr.vmem [resolvable:$true] %s217
          %220 = dma.hbm_to_vmem [thread:$0]  %s215, 128, %s218, %s207
        $region32: #{tpu_custom_call.1} parent=19 // pred_fallthru
          _
      $region20: #{tpu_custom_call.1} parent=5 // pred_fallthru
        _
      %p221 = scmp.le.s32.totalorder 1, %s20
      %p222 = scmp.lt.s32.totalorder %s20, 3
      %p223 = pnand %p221, %p222
      %p224 = pneg %p223
      // Predicated region
      $region33: #{tpu_custom_call.1} parent=5 // pred_check
        _
      $region34: #{tpu_custom_call.1} parent=5 // pred_check_branch
        %226 = sbr.rel (%p223) target = $region36
      $region35: #{tpu_custom_call.1} parent=5 // pred_region
        %s227 = ssub.s32 %s20, 1
        %s228 = sand.u32 %s54, 1
        %s229 = scalar_lea.sflag [#allocation4], %s228
        %s230 = sand.u32 %s54, 1
        %s231 = smul.addr %s230, 8
        %s232 = scalar_lea.vmem [#allocation3], %s231
        // Predicated region
        $region37: #{tpu_custom_call.1} parent=35 // pred_check
          %p233 = pneg %p67
        $region38: #{tpu_custom_call.1} parent=35 // pred_check_branch
          %235 = sbr.rel (%p233) target = $region40
        $region39: #{tpu_custom_call.1} parent=35 // pred_region
          %236 = dma.done %s229, 128
        $region40: #{tpu_custom_call.1} parent=35 // pred_fallthru
          _
        %s237 = sand.u32 %s25, 1
        %s238 = scalar_lea.sflag [#allocation7], %s237
        %s239 = sand.u32 %s80, 1
        %s240 = smul.addr %s239, 8
        %s241 = scalar_lea.vmem [#allocation6], %s240
        // Predicated region
        $region41: #{tpu_custom_call.1} parent=35 // pred_check
          %p242 = pneg %p93
        $region42: #{tpu_custom_call.1} parent=35 // pred_check_branch
          %244 = sbr.rel (%p242) target = $region44
        $region43: #{tpu_custom_call.1} parent=35 // pred_region
          %245 = dma.done %s238, 128
        $region44: #{tpu_custom_call.1} parent=35 // pred_fallthru
          _
        %s246 = sand.u32 %s25, 1
        %s247 = scalar_lea.sflag [#allocation7], %s246
        %s248 = sand.u32 %s106, 1
        %s249 = smul.addr %s248, 8
        %s250 = scalar_lea.vmem [#allocation8], %s249
        // Predicated region
        $region45: #{tpu_custom_call.1} parent=35 // pred_check
          %p251 = pneg %p119
        $region46: #{tpu_custom_call.1} parent=35 // pred_check_branch
          %253 = sbr.rel (%p251) target = $region48
        $region47: #{tpu_custom_call.1} parent=35 // pred_region
          %254 = dma.done %s247, 128
        $region48: #{tpu_custom_call.1} parent=35 // pred_fallthru
          _
        %p255 = pneg %p41
        %p256 = pneg %p38
        %s257 = sand.u32 %s54, 1
        %s258 = scalar_lea.sflag [#allocation4], %s257
        %s259 = sand.u32 %s54, 1
        %s260 = smul.addr %s259, 8
        %s261 = scalar_lea.vmem [#allocation3], %s260
        %p262 = pneg %p67
        %p263 = pneg %p64
        %s264 = sand.u32 %s25, 1
        %s265 = scalar_lea.sflag [#allocation7], %s264
        %s266 = sand.u32 %s80, 1
        %s267 = smul.addr %s266, 8
        %s268 = scalar_lea.vmem [#allocation6], %s267
        %p269 = pneg %p93
        %p270 = pneg %p90
        %s271 = sand.u32 %s25, 1
        %s272 = scalar_lea.sflag [#allocation7], %s271
        %s273 = sand.u32 %s106, 1
        %s274 = smul.addr %s273, 8
        %s275 = scalar_lea.vmem [#allocation8], %s274
        %p276 = pneg %p119
        %p277 = pneg %p116
        %p278 = pneg %p145
        %p279 = pneg %p142
        %s280 = sand.u32 %s132, 1
        %s281 = scalar_lea.sflag [#allocation5], %s280
        %s282 = sand.u32 %s132, 1
        %s283 = smul.addr %s282, 8
        %s284 = scalar_lea.vmem [#allocation9], %s283
        %v285 = vld [vmem:[%s232] sm:$0xff]
        %v286 = vld [vmem:[%s241] sm:$0xff]
        %v287 = vld [vmem:[%s250] sm:$0xff]
        %v288 = vmul.f32 %v285, %v285
        %vm289 = vcmask 261120
        %v290 = vsel %vm289, %v288, 0.0
        %291 = vadd.xlane.f32.xlu0 %v290
        %v292 = vpop.xlane.xlu0 %291
        %v293 = vmul.f32 %v286, %v286
        %v294 = vsel %vm289, %v293, 0.0
        %295 = vadd.xlane.f32.xlu0 %v294
        %v296 = vpop.xlane.xlu0 %295
        %v297 = vmul.f32 %v287, %v287
        %v298 = vsel %vm289, %v297, 0.0
        %299 = vadd.xlane.f32.xlu0 %v298
        %v300 = vpop.xlane.xlu0 %299
        %v301 = vmul.f32 %v285, %v286
        %v302 = vsel %vm289, %v301, 0.0
        %303 = vadd.xlane.f32.xlu0 %v302
        %v304 = vpop.xlane.xlu0 %303
        %v305 = vmul.f32 %v285, %v287
        %v306 = vsel %vm289, %v305, 0.0
        %307 = vadd.xlane.f32.xlu0 %v306
        %v308 = vpop.xlane.xlu0 %307
        %v309 = vmul.f32 %v292, %v296
        %v310 = vmax.f32 %v309, 1e-16
        %v311 = vrsqrt.pop %v310
        %v312 = vmul.f32 %v304, %v311
        %v313 = vmul.f32 %v292, %v300
        %v314 = vmax.f32 %v313, 1e-16
        %v315 = vrsqrt.pop %v314
        %v316 = vmul.f32 %v308, %v315
        %s317 = smul.u32 %s25, 8
        %v318 = vlaneseq
        %v319 = vshrl.u32 %v318, 7
        %v320 = vstv %s317
        %v321 = vadd.s32 %v320, %v319
        %vm322 = vcmp.lt.s32.totalorder %v321, 13
        %vm323 = vcmp.gt.f32.partialorder %v316, %v312
        %vm324 = vmand %vm323, %vm322
        %vm325 = vmxor %vm323, 1
        %vm326 = vmand %vm325, %vm322
        %s327 = sld [smem:[#allocation2]]
        %v328 = vstv %s327
        %v329 = vrcp.pop %v328
        %s330 = vtos %v329
        %v331 = vstv %s330
        %v332 = vmul.f32 %v312, %v331
        %v333 = vmul.f32 %v332, 1.442695
        %v334 = vpow.pop %v333
        %v335 = vsel %vm326, %v334, 0.0
        %v336 = vmul.f32 %v316, %v331
        %v337 = vmul.f32 %v336, 1.442695
        %v338 = vpow.pop %v337
        %v339 = vsel %vm326, %v338, 0.0
        %v340 = vsel %vm324, %v316, 0.0
        %vm341 = vcmask 7168
        %v342 = vsel %vm341, %v335, 0.0
        %343 = vadd.xlane.f32.xlu0 %v342
        %v344 = vpop.xlane.xlu0 %343
        %v345 = vrot.slane %v344, 4
        %v346 = vadd.f32 %v344, %v345
        %v347 = vrot.slane %v346, 2
        %v348 = vadd.f32 %v346, %v347
        %v349 = vrot.slane %v348, 1
        %v350 = vadd.f32 %v348, %v349
        %s351 = vtos %v350
        %v352 = vsel %vm341, %v339, 0.0
        %353 = vadd.xlane.f32.xlu0 %v352
        %v354 = vpop.xlane.xlu0 %353
        %v355 = vrot.slane %v354, 4
        %v356 = vadd.f32 %v354, %v355
        %v357 = vrot.slane %v356, 2
        %v358 = vadd.f32 %v356, %v357
        %v359 = vrot.slane %v358, 1
        %v360 = vadd.f32 %v358, %v359
        %s361 = vtos %v360
        %v362 = vsel %vm341, %v340, 0.0
        %363 = vadd.xlane.f32.xlu0 %v362
        %v364 = vpop.xlane.xlu0 %363
        %v365 = vrot.slane %v364, 4
        %v366 = vadd.f32 %v364, %v365
        %v367 = vrot.slane %v366, 2
        %v368 = vadd.f32 %v366, %v367
        %v369 = vrot.slane %v368, 1
        %v370 = vadd.f32 %v368, %v369
        %s371 = vtos %v370
        %v372 = vlaneseq
        %v373 = vand.u32 %v372, 127
        %vm374 = vcmp.eq.s32.totalorder %v373, 0
        %vm375 = vcmp.eq.s32.totalorder %v373, 1
        %vm376 = vcmp.eq.s32.totalorder %v373, 2
        %v377 = vstv %s371
        %v378 = vsel %vm376, %v377, 0.0
        %v379 = vstv %s361
        %v380 = vsel %vm375, %v379, %v378
        %v381 = vstv %s351
        %v382 = vsel %vm374, %v381, %v380
        %383 = vst [vmem:[%s284] sm:$0xff] %v382
        %s384 = sand.u32 %s132, 1
        %s385 = scalar_lea.sflag [#allocation5], %s384
        %s386 = sand.u32 %s132, 1
        %s387 = smul.addr %s386, 8
        %s388 = scalar_lea.vmem [#allocation9], %s387
        // Predicated region
        $region49: #{tpu_custom_call.1} parent=35 // pred_check
          %p389 = pneg %p142
        $region50: #{tpu_custom_call.1} parent=35 // pred_check_branch
          %391 = sbr.rel (%p389) target = $region52
        $region51: #{tpu_custom_call.1} parent=35 // pred_region
          %s393 = ssub.s32 128, 128
          %394 = vsyncadd %s385, %s393
          %s395 = smul.addr %s25, 128
          %s396 = scalar_lea.hbm %s4, %s395
          %s398 = sshll.u32 %s388, 4
          %s399 = int_to_ptr.vmem [resolvable:$true] %s398
          %401 = dma.vmem_to_hbm [thread:$0]  %s399, 128, %s396, %s385
        $region52: #{tpu_custom_call.1} parent=35 // pred_fallthru
          _
      $region36: #{tpu_custom_call.1} parent=5 // pred_fallthru
        _
      %p402 = scmp.le.s32.totalorder 2, %s20
      // Predicated region
      $region53: #{tpu_custom_call.1} parent=5 // pred_check
        %p403 = pneg %p402
      $region54: #{tpu_custom_call.1} parent=5 // pred_check_branch
        %405 = sbr.rel (%p403) target = $region56
      $region55: #{tpu_custom_call.1} parent=5 // pred_region
        %s406 = ssub.s32 %s20, 2
        // Predicated region
        $region57: #{tpu_custom_call.1} parent=55 // pred_check
          %p407 = pneg %p148
        $region58: #{tpu_custom_call.1} parent=55 // pred_check_branch
          %409 = sbr.rel (%p407) target = $region60
        $region59: #{tpu_custom_call.1} parent=55 // pred_region
          %s410 = sand.u32 %s133, 1
          %s411 = scalar_lea.sflag [#allocation5], %s410
          %s412 = sand.u32 %s133, 1
          %s413 = smul.addr %s412, 8
          %s414 = scalar_lea.vmem [#allocation9], %s413
          %415 = dma.done %s411, 128
        $region60: #{tpu_custom_call.1} parent=55 // pred_fallthru
          _
      $region56: #{tpu_custom_call.1} parent=5 // pred_fallthru
        _
    $region6: #{tpu_custom_call.1} parent=1 // loop_footer
      %s24 = sadd.s32 1, %s20
    $region7: #{tpu_custom_call.1} parent=1 // loop_footer_branch
      %19 = sbr.rel target = $region3
    $region8: #{tpu_custom_call.1} parent=1 // loop_exit
      _
    %416 = vsyncpa [#allocation4], 1
    %s417 = scalar_lea.sflag [#allocation4], 1
    %418 = vsyncpa %s417, 1
    %419 = vsyncpa [#allocation7], 1
    %s420 = scalar_lea.sflag [#allocation7], 1
    %421 = vsyncpa %s420, 1
    %422 = vsyncpa [#allocation5], 1
    %s423 = scalar_lea.sflag [#allocation5], 1
    %424 = vsyncpa %s423, 1

</llo_original>
